<compile_context>
chip_gen: v6e
topology: v6e:2x2x1
jax: 0.10.0
libtpu: 0.0.40
codegen_flags: <defaults>
</compile_context>

<pallas_src>
import functools

import jax
import jax.numpy as jnp
from jax.experimental import pallas as pl
from jax.experimental.pallas import tpu as pltpu


def _round_up(x, m):
    return (x + m - 1) // m * m


def _cdiv(a, b):
    return -(-a // b)


def distance_loss_kernel(wo_ref, rw_ref, iny_ref, ally_ref, out_ref,
                         ayT_ref, aysq_ref, acc_ref, *,
                         margin, total_b, nr_true, has_batch_pad):
    c = pl.program_id(0)               # batch split (parallel / megacore axis)
    i = pl.program_id(1)               # batch tile within the split
    inner = pl.num_programs(1)
    tb = wo_ref.shape[0]

    # ---- hoisted, loop-invariant work: once per split -----------------------
    @pl.when(i == 0)
    def _prologue():
        rw = rw_ref[...].astype(jnp.float32)            # (NRp, Dp)
        all_y = ally_ref[...].astype(jnp.float32)       # (NRp, NRp)
        ay_emb = jnp.dot(all_y, rw,
                         preferred_element_type=jnp.float32)   # (NRp, Dp)
        ayT_ref[...] = ay_emb.T                                 # resident (Dp, NRp)
        aysq = jnp.sum(ay_emb * ay_emb, axis=1)[None, :]        # (1, NRp)
        if nr_true != aysq.shape[1]:
            # Padded relation rows have ay_emb == 0; push them out of the min.
            col = jax.lax.broadcasted_iota(jnp.int32, aysq.shape, 1)
            aysq = jnp.where(col < nr_true, aysq, 1e30)
        aysq_ref[...] = aysq
        acc_ref[...] = jnp.zeros_like(acc_ref)

    # ---- per-tile work -------------------------------------------------------
    wo = wo_ref[...].astype(jnp.float32)                # (TB, Dp)
    in_y = iny_ref[...].astype(jnp.float32)             # (TB, NRp)

    # F.normalize(wo): x * rsqrt(max(sum(x^2), eps^2))  (EUP rsqrt, no divide)
    sumsq = jnp.sum(wo * wo, axis=1, keepdims=True)     # (TB, 1)
    inv_norm = jax.lax.rsqrt(jnp.maximum(sumsq, 1e-24))
    wo_n = wo * inv_norm                                # (TB, Dp)
    wo_sq = sumsq * inv_norm * inv_norm                 # == ||wo_n||^2, no extra reduce

    # Ground-truth relation embedding (in_y varies per tile -> per-step matmul).
    rel_emb = jnp.dot(in_y, rw_ref[...].astype(jnp.float32),
                      preferred_element_type=jnp.float32)        # (TB, Dp)
    dg = wo_n - rel_emb
    gt_dist = jnp.sqrt(jnp.sum(dg * dg, axis=1, keepdims=True))  # (TB, 1)

    # all_dist via Gram expansion; ay_emb_T is resident and pre-transposed.
    cross = jnp.dot(wo_n, ayT_ref[...],
                    preferred_element_type=jnp.float32)          # (TB, NRp)
    all_dist_sq = jnp.maximum(wo_sq + aysq_ref[...] - 2.0 * cross, 0.0)
    all_dist = jnp.sqrt(all_dist_sq)                             # (TB, NRp)

    # Mask ground-truth relation, min over relations.
    t_dist = jnp.min(all_dist + in_y * 10000.0, axis=1, keepdims=True)  # (TB, 1)
    per_example = margin + gt_dist - t_dist                             # (TB, 1)

    # ---- accumulate (VPU add; no per-step cross-sublane reduce) --------------
    if has_batch_pad:
        tile_start = (c * inner + i) * tb

        @pl.when(tile_start + tb > total_b)     # only tiles containing padding
        def _masked_add():
            row = tile_start + jax.lax.broadcasted_iota(jnp.int32, (tb, 1), 0)
            acc_ref[...] += jnp.where(row < total_b, per_example, 0.0)

        @pl.when(tile_start + tb <= total_b)
        def _plain_add():
            acc_ref[...] += per_example
    else:
        acc_ref[...] += per_example

    # ---- finalize: single reduce + mean, lane-dense output block -------------
    @pl.when(i == inner - 1)
    def _finalize():
        total = jnp.sum(acc_ref[...])
        val = total * (1.0 / total_b)
        out_ref[...] = jnp.broadcast_to(val, out_ref.shape).astype(out_ref.dtype)


def distance_loss(wo, rel_weight, in_y, all_y, margin=1.0, block_b=512,
                  num_splits=2, vmem_limit_bytes=None):
    b, d = wo.shape
    nr = rel_weight.shape[0]

    # Lane-dense padding of the relation / embedding dims.
    d_pad = _round_up(d, 128)
    nr_pad = _round_up(nr, 128)

    # Batch tiling: split across cores, then sublane-aligned tiles per split.
    per_split = _cdiv(b, num_splits)
    tb = min(_round_up(per_split, 8), _round_up(block_b, 8))
    b_pad = _round_up(b, num_splits * tb)
    inner = b_pad // (num_splits * tb)
    has_batch_pad = b_pad != b

    # Zero-pad inputs (padded D columns are inert; padded NR rows are masked
    # in-kernel via ay_sq += 1e30 so they never win the min).
    if b_pad != b or d_pad != d:
        wo = jnp.pad(wo, ((0, b_pad - b), (0, d_pad - d)))
    if b_pad != b or nr_pad != nr:
        in_y = jnp.pad(in_y, ((0, b_pad - b), (0, nr_pad - nr)))
    if nr_pad != nr or d_pad != d:
        rel_weight = jnp.pad(rel_weight, ((0, nr_pad - nr), (0, d_pad - d)))
        all_y = jnp.pad(all_y, ((0, nr_pad - nr), (0, nr_pad - nr)))

    kernel = functools.partial(
        distance_loss_kernel,
        margin=float(margin), total_b=b, nr_true=nr,
        has_batch_pad=has_batch_pad)

    cp_kwargs = dict(dimension_semantics=("parallel", "arbitrary"))
    if vmem_limit_bytes is not None:
        cp_kwargs["vmem_limit_bytes"] = int(vmem_limit_bytes)

    out = pl.pallas_call(
        kernel,
        out_shape=jax.ShapeDtypeStruct((num_splits, 8, 128), jnp.float32),
        grid_spec=pltpu.PrefetchScalarGridSpec(
            num_scalar_prefetch=0,
            grid=(num_splits, inner),
            in_specs=[
                # wo: streamed over the batch
                pl.BlockSpec((tb, d_pad), lambda c, i: (c * inner + i, 0)),
                # rel_weight: resident
                pl.BlockSpec((nr_pad, d_pad), lambda c, i: (0, 0)),
                # in_y: streamed over the batch
                pl.BlockSpec((tb, nr_pad), lambda c, i: (c * inner + i, 0)),
                # all_y: resident (only consumed in the hoisted prologue)
                pl.BlockSpec((nr_pad, nr_pad), lambda c, i: (0, 0)),
            ],
            out_specs=pl.BlockSpec((1, 8, 128), lambda c, i: (c, 0, 0)),
            scratch_shapes=[
                pltpu.VMEM((d_pad, nr_pad), jnp.float32),   # ay_emb^T (resident)
                pltpu.VMEM((1, nr_pad), jnp.float32),       # ||ay_emb||^2 + pad mask
                pltpu.VMEM((tb, 1), jnp.float32),           # per-row running sum
            ],
        ),
        compiler_params=pltpu.CompilerParams(**cp_kwargs),
    )(wo, rel_weight, in_y, all_y)

    # Each split wrote its (partial_sum / B) broadcast over its (8,128) block.
    return jnp.sum(out[:, 0, 0])


def distance_loss_ref(wo, rel_weight, in_y, all_y, margin=1.0):
    # Pure-JAX reference mirroring the PyTorch forward.
    row_norm = jnp.sqrt(jnp.sum(wo * wo, axis=1, keepdims=True))
    wo_n = wo / jnp.maximum(row_norm, 1e-12)
    rel_emb = in_y @ rel_weight
    ay_emb = all_y @ rel_weight
    gt_dist = jnp.linalg.norm(wo_n - rel_emb, axis=1)
    all_dist = jnp.linalg.norm(wo_n[:, None, :] - ay_emb[None, :, :], axis=2)
    t_dist = jnp.min(all_dist + in_y * 10000.0, axis=1)
    return jnp.mean(margin + gt_dist - t_dist)


if __name__ == "__main__":
    B, NR, D = 8, 8, 32    # batch, number of relations, relation-embedding dim
    margin = 1.0

    key = jax.random.PRNGKey(0)
    k_wo, k_rw, k_lab = jax.random.split(key, 3)

    wo = jax.random.normal(k_wo, (B, D), dtype=jnp.float32)
    rel_weight = jax.random.normal(k_rw, (NR, D), dtype=jnp.float32) * 0.1
    labels = jax.random.randint(k_lab, (B,), 0, NR)
    in_y = jax.nn.one_hot(labels, NR, dtype=jnp.float32)   # ground-truth one-hots
    all_y = jnp.eye(NR, dtype=jnp.float32)                 # every relation one-hot

    loss = distance_loss(wo, rel_weight, in_y, all_y, margin)
    loss = jax.block_until_ready(loss)

    loss_ref = distance_loss_ref(wo, rel_weight, in_y, all_y, margin)
    assert jnp.allclose(loss, loss_ref, rtol=1e-5, atol=1e-5), (loss, loss_ref)

    print("KERNEL_OK")
</pallas_src>

<mosaic_0001>
module attributes {stable_mosaic.version = 11 : i64} {
  func.func @distance_loss_kernel(%arg0: i32, %arg1: i32, %arg2: memref<8x128xf32, #tpu.memory_space<vmem>>, %arg3: memref<128x128xf32, #tpu.memory_space<vmem>>, %arg4: memref<8x128xf32, #tpu.memory_space<vmem>>, %arg5: memref<128x128xf32, #tpu.memory_space<vmem>>, %arg6: memref<1x8x128xf32, #tpu.memory_space<vmem>>, %arg7: memref<128x128xf32, #tpu.memory_space<vmem>>, %arg8: memref<1x128xf32, #tpu.memory_space<vmem>>, %arg9: memref<8x1xf32, #tpu.memory_space<vmem>>) attributes {dimension_semantics = [#tpu.dimension_semantics<parallel>, #tpu.dimension_semantics<arbitrary>], iteration_bounds = array<i64: 2, 1>, scalar_prefetch = 0 : i64, scratch_operands = 3 : i64, tpu.core_type = #tpu.core_type<tc>, window_params = [{transform_indices = @transform_0, window_bounds = array<i64: 8, 128>}, {pipeline_mode = #tpu.pipeline_mode<synchronous>, transform_indices = @transform_1, window_bounds = array<i64: 128, 128>}, {transform_indices = @transform_2, window_bounds = array<i64: 8, 128>}, {pipeline_mode = #tpu.pipeline_mode<synchronous>, transform_indices = @transform_3, window_bounds = array<i64: 128, 128>}, {transform_indices = @transform_4, window_bounds = array<i64: 1, 8, 128>}]} {
    %c0_i32 = arith.constant 0 : i32
    %0 = arith.cmpi eq, %arg1, %c0_i32 : i32
    %1 = arith.extui %0 : i1 to i32
    %c0_i32_0 = arith.constant 0 : i32
    %2 = arith.cmpi ne, %1, %c0_i32_0 : i32
    scf.if %2 {
      %c0_27 = arith.constant 0 : index
      %c0_28 = arith.constant 0 : index
      %56 = vector.load %arg3[%c0_27, %c0_28] : memref<128x128xf32, #tpu.memory_space<vmem>>, vector<128x128xf32>
      %c0_29 = arith.constant 0 : index
      %c0_30 = arith.constant 0 : index
      %57 = vector.load %arg5[%c0_29, %c0_30] : memref<128x128xf32, #tpu.memory_space<vmem>>, vector<128x128xf32>
      %cst_31 = arith.constant dense<0.000000e+00> : vector<128x128xf32>
      %58 = tpu.matmul %57, %56, %cst_31 {dimension_numbers = #tpu.dot_dimension_numbers<[1], [0], [0], [1], [0, 0, 1, 1], [], []>} : vector<128x128xf32>, vector<128x128xf32>, vector<128x128xf32> -> vector<128x128xf32>
      %59 = tpu.transpose %58, [1, 0] : vector<128x128xf32> -> vector<128x128xf32>
      %c0_32 = arith.constant 0 : index
      %c0_33 = arith.constant 0 : index
      %60 = vector.load %arg7[%c0_32, %c0_33] : memref<128x128xf32, #tpu.memory_space<vmem>>, vector<128x128xf32>
      tpu.vector_store %arg7[%c0_32, %c0_33], %59 {strides = array<i32>} : memref<128x128xf32, #tpu.memory_space<vmem>>, vector<128x128xf32>,
      %61 = arith.mulf %58, %58 : vector<128x128xf32>
      %cst_34 = arith.constant dense<0.000000e+00> : vector<128xf32>
      %62 = vector.multi_reduction <add>, %61, %cst_34 [1] : vector<128x128xf32> to vector<128xf32>
      %63 = vector.shape_cast %62 : vector<128xf32> to vector<1x128xf32>
      %64 = tpu.iota {dimensions = array<i32: 1>} : vector<1x128xi32>
      %c8_i32_35 = arith.constant 8 : i32
      %65 = vector.broadcast %c8_i32_35 : i32 to vector<1x128xi32>
      %66 = arith.cmpi slt, %64, %65 : vector<1x128xi32>
      %cst_36 = arith.constant 1.000000e+30 : f32
      %67 = vector.broadcast %cst_36 : f32 to vector<1x128xf32>
      %68 = arith.select %66, %63, %67 : vector<1x128xi1>, vector<1x128xf32>
      %c0_37 = arith.constant 0 : index
      %c0_38 = arith.constant 0 : index
      %69 = vector.load %arg8[%c0_37, %c0_38] : memref<1x128xf32, #tpu.memory_space<vmem>>, vector<1x128xf32>
      tpu.vector_store %arg8[%c0_37, %c0_38], %68 {strides = array<i32>} : memref<1x128xf32, #tpu.memory_space<vmem>>, vector<1x128xf32>,
      %cst_39 = arith.constant 0.000000e+00 : f32
      %70 = vector.broadcast %cst_39 : f32 to vector<8x1xf32>
      %c0_40 = arith.constant 0 : index
      %c0_41 = arith.constant 0 : index
      %71 = vector.load %arg9[%c0_40, %c0_41] : memref<8x1xf32, #tpu.memory_space<vmem>>, vector<8x1xf32>
      tpu.vector_store %arg9[%c0_40, %c0_41], %70 {strides = array<i32>} : memref<8x1xf32, #tpu.memory_space<vmem>>, vector<8x1xf32>,
    } else {
    }
    %c0 = arith.constant 0 : index
    %c0_1 = arith.constant 0 : index
    %3 = vector.load %arg2[%c0, %c0_1] : memref<8x128xf32, #tpu.memory_space<vmem>>, vector<8x128xf32>
    %c0_2 = arith.constant 0 : index
    %c0_3 = arith.constant 0 : index
    %4 = vector.load %arg4[%c0_2, %c0_3] : memref<8x128xf32, #tpu.memory_space<vmem>>, vector<8x128xf32>
    %5 = arith.mulf %3, %3 : vector<8x128xf32>
    %cst = arith.constant dense<0.000000e+00> : vector<8xf32>
    %6 = vector.multi_reduction <add>, %5, %cst [1] : vector<8x128xf32> to vector<8xf32>
    %7 = vector.shape_cast %6 : vector<8xf32> to vector<8x1xf32>
    %cst_4 = arith.constant 1.000000e-24 : f32
    %8 = vector.broadcast %cst_4 : f32 to vector<8x1xf32>
    %9 = arith.maximumf %7, %8 : vector<8x1xf32>
    %10 = math.rsqrt %9 : vector<8x1xf32>
    %11 = vector.broadcast %10 : vector<8x1xf32> to vector<8x128xf32>
    %12 = arith.mulf %3, %11 : vector<8x128xf32>
    %13 = arith.mulf %7, %10 : vector<8x1xf32>
    %14 = arith.mulf %13, %10 : vector<8x1xf32>
    %c0_5 = arith.constant 0 : index
    %c0_6 = arith.constant 0 : index
    %15 = vector.load %arg3[%c0_5, %c0_6] : memref<128x128xf32, #tpu.memory_space<vmem>>, vector<128x128xf32>
    %cst_7 = arith.constant dense<0.000000e+00> : vector<8x128xf32>
    %16 = tpu.matmul %4, %15, %cst_7 {dimension_numbers = #tpu.dot_dimension_numbers<[1], [0], [0], [1], [0, 0, 1, 1], [], []>} : vector<8x128xf32>, vector<128x128xf32>, vector<8x128xf32> -> vector<8x128xf32>
    %17 = arith.subf %12, %16 : vector<8x128xf32>
    %18 = arith.mulf %17, %17 : vector<8x128xf32>
    %cst_8 = arith.constant dense<0.000000e+00> : vector<8xf32>
    %19 = vector.multi_reduction <add>, %18, %cst_8 [1] : vector<8x128xf32> to vector<8xf32>
    %20 = vector.shape_cast %19 : vector<8xf32> to vector<8x1xf32>
    %21 = math.sqrt %20 : vector<8x1xf32>
    %c0_9 = arith.constant 0 : index
    %c0_10 = arith.constant 0 : index
    %22 = vector.load %arg7[%c0_9, %c0_10] : memref<128x128xf32, #tpu.memory_space<vmem>>, vector<128x128xf32>
    %cst_11 = arith.constant dense<0.000000e+00> : vector<8x128xf32>
    %23 = tpu.matmul %12, %22, %cst_11 {dimension_numbers = #tpu.dot_dimension_numbers<[1], [0], [0], [1], [0, 0, 1, 1], [], []>} : vector<8x128xf32>, vector<128x128xf32>, vector<8x128xf32> -> vector<8x128xf32>
    %c0_12 = arith.constant 0 : index
    %c0_13 = arith.constant 0 : index
    %24 = vector.load %arg8[%c0_12, %c0_13] : memref<1x128xf32, #tpu.memory_space<vmem>>, vector<1x128xf32>
    %25 = vector.broadcast %14 : vector<8x1xf32> to vector<8x128xf32>
    %26 = vector.broadcast %24 : vector<1x128xf32> to vector<8x128xf32>
    %27 = arith.addf %25, %26 : vector<8x128xf32>
    %cst_14 = arith.constant 2.000000e+00 : f32
    %28 = vector.broadcast %cst_14 : f32 to vector<8x128xf32>
    %29 = arith.mulf %28, %23 : vector<8x128xf32>
    %30 = arith.subf %27, %29 : vector<8x128xf32>
    %cst_15 = arith.constant 0.000000e+00 : f32
    %31 = vector.broadcast %cst_15 : f32 to vector<8x128xf32>
    %32 = arith.maximumf %30, %31 : vector<8x128xf32>
    %33 = math.sqrt %32 : vector<8x128xf32>
    %cst_16 = arith.constant 1.000000e+04 : f32
    %34 = vector.broadcast %cst_16 : f32 to vector<8x128xf32>
    %35 = arith.mulf %4, %34 : vector<8x128xf32>
    %36 = arith.addf %33, %35 : vector<8x128xf32>
    %cst_17 = arith.constant dense<0x7F800000> : vector<8xf32>
    %37 = vector.multi_reduction <minimumf>, %36, %cst_17 [1] : vector<8x128xf32> to vector<8xf32>
    %38 = vector.shape_cast %37 : vector<8xf32> to vector<8x1xf32>
    %cst_18 = arith.constant 1.000000e+00 : f32
    %39 = vector.broadcast %cst_18 : f32 to vector<8x1xf32>
    %40 = arith.addf %39, %21 : vector<8x1xf32>
    %41 = arith.subf %40, %38 : vector<8x1xf32>
    %c1_i32 = arith.constant 1 : i32
    %42 = arith.muli %arg0, %c1_i32 : i32
    %43 = arith.addi %42, %arg1 : i32
    %c8_i32 = arith.constant 8 : i32
    %44 = arith.muli %43, %c8_i32 : i32
    %c8_i32_19 = arith.constant 8 : i32
    %45 = arith.addi %44, %c8_i32_19 : i32
    %c8_i32_20 = arith.constant 8 : i32
    %46 = arith.cmpi sgt, %45, %c8_i32_20 : i32
    %47 = arith.extui %46 : i1 to i32
    %c0_i32_21 = arith.constant 0 : i32
    %48 = arith.cmpi ne, %47, %c0_i32_21 : i32
    scf.if %48 {
      %56 = tpu.iota {dimensions = array<i32: 0>} : vector<8x1xi32>
      %57 = vector.broadcast %44 : i32 to vector<8x1xi32>
      %58 = arith.addi %57, %56 : vector<8x1xi32>
      %c0_27 = arith.constant 0 : index
      %c0_28 = arith.constant 0 : index
      %59 = vector.load %arg9[%c0_27, %c0_28] : memref<8x1xf32, #tpu.memory_space<vmem>>, vector<8x1xf32>
      %c8_i32_29 = arith.constant 8 : i32
      %60 = vector.broadcast %c8_i32_29 : i32 to vector<8x1xi32>
      %61 = arith.cmpi slt, %58, %60 : vector<8x1xi32>
      %cst_30 = arith.constant 0.000000e+00 : f32
      %62 = vector.broadcast %cst_30 : f32 to vector<8x1xf32>
      %63 = arith.select %61, %41, %62 : vector<8x1xi1>, vector<8x1xf32>
      %64 = arith.addf %59, %63 : vector<8x1xf32>
      %c0_31 = arith.constant 0 : index
      %c0_32 = arith.constant 0 : index
      %65 = vector.load %arg9[%c0_31, %c0_32] : memref<8x1xf32, #tpu.memory_space<vmem>>, vector<8x1xf32>
      tpu.vector_store %arg9[%c0_31, %c0_32], %64 {strides = array<i32>} : memref<8x1xf32, #tpu.memory_space<vmem>>, vector<8x1xf32>,
    } else {
    }
    %c8_i32_22 = arith.constant 8 : i32
    %49 = arith.addi %44, %c8_i32_22 : i32
    %c8_i32_23 = arith.constant 8 : i32
    %50 = arith.cmpi sle, %49, %c8_i32_23 : i32
    %51 = arith.extui %50 : i1 to i32
    %c0_i32_24 = arith.constant 0 : i32
    %52 = arith.cmpi ne, %51, %c0_i32_24 : i32
    scf.if %52 {
      %c0_27 = arith.constant 0 : index
      %c0_28 = arith.constant 0 : index
      %56 = vector.load %arg9[%c0_27, %c0_28] : memref<8x1xf32, #tpu.memory_space<vmem>>, vector<8x1xf32>
      %57 = arith.addf %56, %41 : vector<8x1xf32>
      %c0_29 = arith.constant 0 : index
      %c0_30 = arith.constant 0 : index
      %58 = vector.load %arg9[%c0_29, %c0_30] : memref<8x1xf32, #tpu.memory_space<vmem>>, vector<8x1xf32>
      tpu.vector_store %arg9[%c0_29, %c0_30], %57 {strides = array<i32>} : memref<8x1xf32, #tpu.memory_space<vmem>>, vector<8x1xf32>,
    } else {
    }
    %c0_i32_25 = arith.constant 0 : i32
    %53 = arith.cmpi eq, %arg1, %c0_i32_25 : i32
    %54 = arith.extui %53 : i1 to i32
    %c0_i32_26 = arith.constant 0 : i32
    %55 = arith.cmpi ne, %54, %c0_i32_26 : i32
    scf.if %55 {
      %c0_27 = arith.constant 0 : index
      %c0_28 = arith.constant 0 : index
      %56 = vector.load %arg9[%c0_27, %c0_28] : memref<8x1xf32, #tpu.memory_space<vmem>>, vector<8x1xf32>
      %57 = vector.shape_cast %56 : vector<8x1xf32> to vector<1x8x1xf32>
      %cst_29 = arith.constant dense<0.000000e+00> : vector<1xf32>
      %58 = vector.multi_reduction <add>, %57, %cst_29 [1, 2] : vector<1x8x1xf32> to vector<1xf32>
      %59 = vector.shape_cast %58 : vector<1xf32> to vector<1x1x1xf32>
      %60 = vector.extract %59[0, 0, 0] : f32 from vector<1x1x1xf32>
      %cst_30 = arith.constant 1.250000e-01 : f32
      %61 = arith.mulf %60, %cst_30 : f32
      %62 = vector.broadcast %61 : f32 to vector<1x8x128xf32>
      %c0_31 = arith.constant 0 : index
      %c0_32 = arith.constant 0 : index
      %c0_33 = arith.constant 0 : index
      %63 = vector.load %arg6[%c0_31, %c0_32, %c0_33] : memref<1x8x128xf32, #tpu.memory_space<vmem>>, vector<1x8x128xf32>
      tpu.vector_store %arg6[%c0_31, %c0_32, %c0_33], %62 {strides = array<i32>} : memref<1x8x128xf32, #tpu.memory_space<vmem>>, vector<1x8x128xf32>,
    } else {
    }
    return
  }
  func.func @transform_0(%arg0: i32, %arg1: i32) -> (i32, i32) {
    %c1_i32 = arith.constant 1 : i32
    %0 = arith.muli %arg0, %c1_i32 : i32
    %1 = arith.addi %0, %arg1 : i32
    %c0_i32 = arith.constant 0 : i32
    %c0_i32_0 = arith.constant 0 : i32
    return %1, %c0_i32 : i32, i32
  }
  func.func @transform_1(%arg0: i32, %arg1: i32) -> (i32, i32) {
    %c0_i32 = arith.constant 0 : i32
    %c0_i32_0 = arith.constant 0 : i32
    %c0_i32_1 = arith.constant 0 : i32
    return %c0_i32, %c0_i32_0 : i32, i32
  }
  func.func @transform_2(%arg0: i32, %arg1: i32) -> (i32, i32) {
    %c1_i32 = arith.constant 1 : i32
    %0 = arith.muli %arg0, %c1_i32 : i32
    %1 = arith.addi %0, %arg1 : i32
    %c0_i32 = arith.constant 0 : i32
    %c0_i32_0 = arith.constant 0 : i32
    return %1, %c0_i32 : i32, i32
  }
  func.func @transform_3(%arg0: i32, %arg1: i32) -> (i32, i32) {
    %c0_i32 = arith.constant 0 : i32
    %c0_i32_0 = arith.constant 0 : i32
    %c0_i32_1 = arith.constant 0 : i32
    return %c0_i32, %c0_i32_0 : i32, i32
  }
  func.func @transform_4(%arg0: i32, %arg1: i32) -> (i32, i32, i32) {
    %c0_i32 = arith.constant 0 : i32
    %c0_i32_0 = arith.constant 0 : i32
    %c0_i32_1 = arith.constant 0 : i32
    return %arg0, %c0_i32, %c0_i32_0 : i32, i32, i32
  }
}

</mosaic_0001>

<llo_original>
// kernel: tpu_custom_call.1
$region0: #{tpu_custom_call.1}
  #allocation0 [shape = 'u32[]', space=smem, size = 0x4, offset = 0x4, fixed_abs, tag = 'smem constant byte address 0x4 - core index']
  #allocation1 [shape = 'u32[144,128]{1,0:T(1,128)}', space=vmem, size = 0x12000, scoped, tag = 'internal scratch']
  #allocation2 [shape = 'f32[128,128]{1,0:T(8,128)}', space=vmem, size = 0x10000, scoped, tag = 'scratch operand']
  #allocation3 [shape = 'f32[1,128]{1,0:T(1,128)}', space=vmem, size = 0x200, scoped, tag = 'scratch operand']
  #allocation4 [shape = 'f32[8,1]{1,0:T(8,128)}', space=vmem, size = 0x1000, scoped, tag = 'scratch operand']
  %s0 = inlined_call_operand.hbm [shape: f32[16,128], index: 0, kind: input, shape index: {}]
  %s1 = inlined_call_operand.hbm [shape: f32[128,128], index: 1, kind: input, shape index: {}]
  %s2 = inlined_call_operand.hbm [shape: f32[16,128], index: 2, kind: input, shape index: {}]
  %s3 = inlined_call_operand.hbm [shape: f32[128,128], index: 3, kind: input, shape index: {}]
  %s4 = inlined_call_operand.hbm [shape: f32[2,8,128], index: 4, kind: output, shape index: {}]
  %s5 = sld [smem:[#allocation0]]
  $region81: #{tpu_custom_call.1} parent=0
    _
  %s7 = ssub.s32 1, %s5
  %s8 = scalar_select 0, %s7, %s5
  $region1: #{tpu_custom_call.1} parent=0
    #allocation5 [shape = 'u8[8192]{0}', space=vmem, size = 0x2000, scoped, tag = 'input window, operand 0']
    #allocation6 [shape = 's32[2]{0}', space=sflag, size = 0x8, scoped, tag = 'scoped memory for tpu_custom_call.1']
    #allocation7 [shape = 's32[2]{0}', space=sflag, size = 0x8, scoped, tag = 'scoped memory for tpu_custom_call.1']
    #allocation8 [shape = 'u8[65536]{0}', space=vmem, size = 0x10000, scoped, tag = 'input window, operand 1, single buffered']
    #allocation9 [shape = 's32[1]{0}', space=sflag, size = 0x4, scoped, tag = 'scoped memory for tpu_custom_call.1']
    #allocation10 [shape = 'u8[8192]{0}', space=vmem, size = 0x2000, scoped, tag = 'input window, operand 2']
    #allocation11 [shape = 'u8[65536]{0}', space=vmem, size = 0x10000, scoped, tag = 'input window, operand 3, single buffered']
    #allocation12 [shape = 'u8[8192]{0}', space=vmem, size = 0x2000, scoped, tag = 'output window, operand 0']
    %9 = vsyncpa [#allocation6], 0
    %s10 = scalar_lea.sflag [#allocation6], 1
    %11 = vsyncpa %s10, 0
    %12 = vsyncpa [#allocation9], 0
    %13 = vsyncpa [#allocation7], 0
    %s14 = scalar_lea.sflag [#allocation7], 1
    %15 = vsyncpa %s14, 0
    loop: start=0, step=1, limit=4
    $region2: #{tpu_custom_call.1} parent=1 // loop_pre_header
      _
    $region3: #{tpu_custom_call.1} parent=1 // loop_header
      %s17 = sphi 0, %s21
      %p18 = scmp.ge.s32.totalorder %s17, 4
      %s24 = sphi 0, %s36
      %s25 = sphi 0, %s32
      %s26 = sphi 0, %s24
      %s27 = sphi 0, %s25
      %s28 = sphi 0, %s26
      %s29 = sphi 0, %s27
      %s41 = sphi 0, %s43
      %s44 = sphi 0, %s41
      %s45 = sphi 0, %s44
      %s61 = sphi 0, %s45
      %s65 = sphi 0, %s65
      %s67 = sphi 0, %s65
      %s68 = sphi 0, %s67
      %s82 = sphi 0, %s68
      %s90 = sphi 0, %s92
      %s93 = sphi 0, %s90
      %s94 = sphi 0, %s93
      %s110 = sphi 0, %s94
      %s114 = sphi 0, %s114
      %s116 = sphi 0, %s114
      %s117 = sphi 0, %s116
      %s131 = sphi 0, %s117
      %s137 = sphi 0, %s139
      %s140 = sphi 0, %s137
      %s141 = sphi 0, %s140
      %s157 = sphi 0, %s141
    $region4: #{tpu_custom_call.1} parent=1 // loop_header_branch
      %20 = sbr.rel (%p18) target = $region8
    $region5: #{tpu_custom_call.1} parent=1 // loop_body
      %s22 = ssub.s32 %s17, 1
      %s23 = ssub.s32 %s17, 2
      %s30 = sadd.s32 1, %s25
      %p31 = scmp.ge.s32.totalorder %s30, 1
      %s32 = scalar_select %p31, 0, %s30
      %s33 = sadd.s32 1, %s24
      %s34 = scalar_select %p31, %s33, %s24
      %p35 = scmp.ge.s32.totalorder %s34, 2
      %s36 = scalar_select %p35, 0, %s34
      %s37 = sadd.s32 %s24, %s25
      %s38 = sadd.s32 %s36, %s32
      %s39 = ssub.s32 %s37, %s38
      %p40 = scmp.eq.s32.totalorder %s39, 0
      %s42 = sadd.s32 %s41, 1
      %s43 = scalar_select %p40, %s41, %s42
      %p46 = pneg %p40
      %p47 = scmp.eq.s32.totalorder %s17, 1
      %p48 = por %p46, %p47
      %p49 = scmp.ne.s32.totalorder %s41, %s44
      %p50 = scmp.eq.s32.totalorder %s17, 0
      %p51 = por %p49, %p50
      %p52 = scmp.ne.s32.totalorder %s41, %s44
      %p53 = scmp.eq.s32.totalorder %s22, 1
      %p54 = por %p52, %p53
      %p55 = scmp.ne.s32.totalorder %s44, %s45
      %p56 = scmp.eq.s32.totalorder %s22, 0
      %p57 = por %p55, %p56
      %p58 = scmp.ne.s32.totalorder %s44, %s45
      %p59 = scmp.eq.s32.totalorder %s23, 1
      %p60 = por %p58, %p59
      %p62 = scmp.ne.s32.totalorder %s45, %s61
      %p63 = scmp.eq.s32.totalorder %s23, 0
      %p64 = por %p62, %p63
      %s66 = sadd.s32 %s65, 1
      %p69 = scmp.eq.s32.totalorder %s17, 1
      %p70 = scmp.ne.s32.totalorder %s65, %s67
      %p71 = scmp.eq.s32.totalorder %s17, 0
      %p72 = por %p70, %p71
      %p73 = scmp.ne.s32.totalorder %s65, %s67
      %p74 = scmp.eq.s32.totalorder %s22, 1
      %p75 = por %p73, %p74
      %p76 = scmp.ne.s32.totalorder %s67, %s68
      %p77 = scmp.eq.s32.totalorder %s22, 0
      %p78 = por %p76, %p77
      %p79 = scmp.ne.s32.totalorder %s67, %s68
      %p80 = scmp.eq.s32.totalorder %s23, 1
      %p81 = por %p79, %p80
      %p83 = scmp.ne.s32.totalorder %s68, %s82
      %p84 = scmp.eq.s32.totalorder %s23, 0
      %p85 = por %p83, %p84
      %s86 = sadd.s32 %s24, %s25
      %s87 = sadd.s32 %s36, %s32
      %s88 = ssub.s32 %s86, %s87
      %p89 = scmp.eq.s32.totalorder %s88, 0
      %s91 = sadd.s32 %s90, 1
      %s92 = scalar_select %p89, %s90, %s91
      %p95 = pneg %p89
      %p96 = scmp.eq.s32.totalorder %s17, 1
      %p97 = por %p95, %p96
      %p98 = scmp.ne.s32.totalorder %s90, %s93
      %p99 = scmp.eq.s32.totalorder %s17, 0
      %p100 = por %p98, %p99
      %p101 = scmp.ne.s32.totalorder %s90, %s93
      %p102 = scmp.eq.s32.totalorder %s22, 1
      %p103 = por %p101, %p102
      %p104 = scmp.ne.s32.totalorder %s93, %s94
      %p105 = scmp.eq.s32.totalorder %s22, 0
      %p106 = por %p104, %p105
      %p107 = scmp.ne.s32.totalorder %s93, %s94
      %p108 = scmp.eq.s32.totalorder %s23, 1
      %p109 = por %p107, %p108
      %p111 = scmp.ne.s32.totalorder %s94, %s110
      %p112 = scmp.eq.s32.totalorder %s23, 0
      %p113 = por %p111, %p112
      %s115 = sadd.s32 %s114, 1
      %p118 = scmp.eq.s32.totalorder %s17, 1
      %p119 = scmp.ne.s32.totalorder %s114, %s116
      %p120 = scmp.eq.s32.totalorder %s17, 0
      %p121 = por %p119, %p120
      %p122 = scmp.ne.s32.totalorder %s114, %s116
      %p123 = scmp.eq.s32.totalorder %s22, 1
      %p124 = por %p122, %p123
      %p125 = scmp.ne.s32.totalorder %s116, %s117
      %p126 = scmp.eq.s32.totalorder %s22, 0
      %p127 = por %p125, %p126
      %p128 = scmp.ne.s32.totalorder %s116, %s117
      %p129 = scmp.eq.s32.totalorder %s23, 1
      %p130 = por %p128, %p129
      %p132 = scmp.ne.s32.totalorder %s117, %s131
      %p133 = scmp.eq.s32.totalorder %s23, 0
      %p134 = por %p132, %p133
      %s135 = ssub.s32 %s24, %s36
      %p136 = scmp.eq.s32.totalorder %s135, 0
      %s138 = sadd.s32 %s137, 1
      %s139 = scalar_select %p136, %s137, %s138
      %p142 = pneg %p136
      %p143 = scmp.eq.s32.totalorder %s17, 1
      %p144 = por %p142, %p143
      %p145 = scmp.ne.s32.totalorder %s137, %s140
      %p146 = scmp.eq.s32.totalorder %s17, 0
      %p147 = por %p145, %p146
      %p148 = scmp.ne.s32.totalorder %s137, %s140
      %p149 = scmp.eq.s32.totalorder %s22, 1
      %p150 = por %p148, %p149
      %p151 = scmp.ne.s32.totalorder %s140, %s141
      %p152 = scmp.eq.s32.totalorder %s22, 0
      %p153 = por %p151, %p152
      %p154 = scmp.ne.s32.totalorder %s140, %s141
      %p155 = scmp.eq.s32.totalorder %s23, 1
      %p156 = por %p154, %p155
      %p158 = scmp.ne.s32.totalorder %s141, %s157
      %p159 = scmp.eq.s32.totalorder %s23, 0
      %p160 = por %p158, %p159
      %p161 = scmp.le.s32.totalorder 1, %s17
      %p162 = scmp.lt.s32.totalorder %s17, 3
      %p163 = pnand %p161, %p162
      %p164 = pneg %p163
      // Predicated region
      $region9: #{tpu_custom_call.1} parent=5 // pred_check
        _
      $region10: #{tpu_custom_call.1} parent=5 // pred_check_branch
        %166 = sbr.rel (%p163) target = $region12
      $region11: #{tpu_custom_call.1} parent=5 // pred_region
        %s167 = ssub.s32 %s17, 1
        // Predicated region
        $region13: #{tpu_custom_call.1} parent=11 // pred_check
          %p168 = pneg %p78
        $region14: #{tpu_custom_call.1} parent=11 // pred_check_branch
          %170 = sbr.rel (%p168) target = $region16
        $region15: #{tpu_custom_call.1} parent=11 // pred_region
          %s172 = ssub.s32 2048, 2048
          %173 = vsyncadd [#allocation9], %s172
          %s174 = sshll.u32 [#allocation8], 4
          %s175 = int_to_ptr.vmem [resolvable:$true] %s174
          %180 = dma.hbm_to_vmem [thread:$0]  %s1, 2048, %s175, [#allocation9], 128, 128, 8
        $region16: #{tpu_custom_call.1} parent=11 // pred_fallthru
          _
        // Predicated region
        $region17: #{tpu_custom_call.1} parent=11 // pred_check
          %p181 = pneg %p127
        $region18: #{tpu_custom_call.1} parent=11 // pred_check_branch
          %183 = sbr.rel (%p181) target = $region20
        $region19: #{tpu_custom_call.1} parent=11 // pred_region
          %s185 = ssub.s32 2048, 2048
          %186 = vsyncadd [#allocation9], %s185
          %s187 = sshll.u32 [#allocation11], 4
          %s188 = int_to_ptr.vmem [resolvable:$true] %s187
          %193 = dma.hbm_to_vmem [thread:$0]  %s3, 2048, %s188, [#allocation9], 128, 128, 8
        $region20: #{tpu_custom_call.1} parent=11 // pred_fallthru
          _
      $region12: #{tpu_custom_call.1} parent=5 // pred_fallthru
        _
      %p194 = scmp.lt.s32.totalorder %s17, 2
      // Predicated region
      $region21: #{tpu_custom_call.1} parent=5 // pred_check
        %p195 = pneg %p194
      $region22: #{tpu_custom_call.1} parent=5 // pred_check_branch
        %197 = sbr.rel (%p195) target = $region24
      $region23: #{tpu_custom_call.1} parent=5 // pred_region
        // Predicated region
        $region25: #{tpu_custom_call.1} parent=23 // pred_check
          %p198 = pneg %p51
        $region26: #{tpu_custom_call.1} parent=23 // pred_check_branch
          %200 = sbr.rel (%p198) target = $region28
        $region27: #{tpu_custom_call.1} parent=23 // pred_region
          %s201 = sand.u32 %s17, 1
          %s202 = scalar_lea.sflag [#allocation6], %s201
          %s203 = sand.u32 %s41, 1
          %s204 = smul.addr %s203, 8
          %s205 = scalar_lea.vmem [#allocation5], %s204
          %s206 = sadd.s32 %s24, %s25
          %s208 = ssub.s32 128, 128
          %209 = vsyncadd %s202, %s208
          %s210 = smul.addr %s206, 128
          %s211 = scalar_lea.hbm %s0, %s210
          %s213 = sshll.u32 %s205, 4
          %s214 = int_to_ptr.vmem [resolvable:$true] %s213
          %216 = dma.hbm_to_vmem [thread:$0]  %s211, 128, %s214, %s202
        $region28: #{tpu_custom_call.1} parent=23 // pred_fallthru
          _
        // Predicated region
        $region29: #{tpu_custom_call.1} parent=23 // pred_check
          %p217 = pneg %p100
        $region30: #{tpu_custom_call.1} parent=23 // pred_check_branch
          %219 = sbr.rel (%p217) target = $region32
        $region31: #{tpu_custom_call.1} parent=23 // pred_region
          %s220 = sand.u32 %s17, 1
          %s221 = scalar_lea.sflag [#allocation6], %s220
          %s222 = sand.u32 %s90, 1
          %s223 = smul.addr %s222, 8
          %s224 = scalar_lea.vmem [#allocation10], %s223
          %s225 = sadd.s32 %s24, %s25
          %s227 = ssub.s32 128, 128
          %228 = vsyncadd %s221, %s227
          %s229 = smul.addr %s225, 128
          %s230 = scalar_lea.hbm %s2, %s229
          %s232 = sshll.u32 %s224, 4
          %s233 = int_to_ptr.vmem [resolvable:$true] %s232
          %235 = dma.hbm_to_vmem [thread:$0]  %s230, 128, %s233, %s221
        $region32: #{tpu_custom_call.1} parent=23 // pred_fallthru
          _
      $region24: #{tpu_custom_call.1} parent=5 // pred_fallthru
        _
      %p236 = scmp.le.s32.totalorder 1, %s17
      %p237 = scmp.lt.s32.totalorder %s17, 3
      %p238 = pnand %p236, %p237
      %p239 = pneg %p238
      // Predicated region
      $region33: #{tpu_custom_call.1} parent=5 // pred_check
        _
      $region34: #{tpu_custom_call.1} parent=5 // pred_check_branch
        %241 = sbr.rel (%p238) target = $region36
      $region35: #{tpu_custom_call.1} parent=5 // pred_region
        %s242 = ssub.s32 %s17, 1
        %s243 = sand.u32 %s22, 1
        %s244 = scalar_lea.sflag [#allocation6], %s243
        %s245 = sand.u32 %s44, 1
        %s246 = smul.addr %s245, 8
        %s247 = scalar_lea.vmem [#allocation5], %s246
        // Predicated region
        $region37: #{tpu_custom_call.1} parent=35 // pred_check
          %p248 = pneg %p57
        $region38: #{tpu_custom_call.1} parent=35 // pred_check_branch
          %250 = sbr.rel (%p248) target = $region40
        $region39: #{tpu_custom_call.1} parent=35 // pred_region
          %251 = dma.done %s244, 128
        $region40: #{tpu_custom_call.1} parent=35 // pred_fallthru
          _
        // Predicated region
        $region41: #{tpu_custom_call.1} parent=35 // pred_check
          %p252 = pneg %p78
        $region42: #{tpu_custom_call.1} parent=35 // pred_check_branch
          %254 = sbr.rel (%p252) target = $region44
        $region43: #{tpu_custom_call.1} parent=35 // pred_region
          %255 = dma.done [#allocation9], 2048
        $region44: #{tpu_custom_call.1} parent=35 // pred_fallthru
          _
        %s256 = sand.u32 %s22, 1
        %s257 = scalar_lea.sflag [#allocation6], %s256
        %s258 = sand.u32 %s93, 1
        %s259 = smul.addr %s258, 8
        %s260 = scalar_lea.vmem [#allocation10], %s259
        // Predicated region
        $region45: #{tpu_custom_call.1} parent=35 // pred_check
          %p261 = pneg %p106
        $region46: #{tpu_custom_call.1} parent=35 // pred_check_branch
          %263 = sbr.rel (%p261) target = $region48
        $region47: #{tpu_custom_call.1} parent=35 // pred_region
          %264 = dma.done %s257, 128
        $region48: #{tpu_custom_call.1} parent=35 // pred_fallthru
          _
        // Predicated region
        $region49: #{tpu_custom_call.1} parent=35 // pred_check
          %p265 = pneg %p127
        $region50: #{tpu_custom_call.1} parent=35 // pred_check_branch
          %267 = sbr.rel (%p265) target = $region52
        $region51: #{tpu_custom_call.1} parent=35 // pred_region
          %268 = dma.done [#allocation9], 2048
        $region52: #{tpu_custom_call.1} parent=35 // pred_fallthru
          _
        %s269 = sand.u32 %s22, 1
        %s270 = scalar_lea.sflag [#allocation6], %s269
        %s271 = sand.u32 %s44, 1
        %s272 = smul.addr %s271, 8
        %s273 = scalar_lea.vmem [#allocation5], %s272
        %p274 = pneg %p57
        %p275 = pneg %p54
        %p276 = pneg %p78
        %p277 = pneg %p75
        %s278 = sand.u32 %s22, 1
        %s279 = scalar_lea.sflag [#allocation6], %s278
        %s280 = sand.u32 %s93, 1
        %s281 = smul.addr %s280, 8
        %s282 = scalar_lea.vmem [#allocation10], %s281
        %p283 = pneg %p106
        %p284 = pneg %p103
        %p285 = pneg %p127
        %p286 = pneg %p124
        %p287 = pneg %p153
        %p288 = pneg %p150
        %s289 = sand.u32 %s140, 1
        %s290 = scalar_lea.sflag [#allocation7], %s289
        %s291 = sand.u32 %s140, 1
        %s292 = smul.addr %s291, 8
        %s293 = scalar_lea.vmem [#allocation12], %s292
        %s294 = sadd.s32 %s26, %s27
        %s295 = sadd.s32 %s26, %s27
        %p296 = scmp.eq.s32.totalorder %s27, 0
        // Predicated region
        $region53: #{tpu_custom_call.1} parent=35 // pred_check
          %p297 = pneg %p296
        $region54: #{tpu_custom_call.1} parent=35 // pred_check_branch
          %299 = sbr.rel (%p297) target = $region56
        $region55: #{tpu_custom_call.1} parent=35 // pred_region
          %v300 = vld [vmem:[#allocation8] sm:$0xff]
          %v301 = vld [vmem:[#allocation8 + $0x8] sm:$0xff]
          %v302 = vld [vmem:[#allocation8 + $0x10] sm:$0xff]
          %v303 = vld [vmem:[#allocation8 + $0x18] sm:$0xff]
          %v304 = vld [vmem:[#allocation8 + $0x20] sm:$0xff]
          %v305 = vld [vmem:[#allocation8 + $0x28] sm:$0xff]
          %v306 = vld [vmem:[#allocation8 + $0x30] sm:$0xff]
          %v307 = vld [vmem:[#allocation8 + $0x38] sm:$0xff]
          %v308 = vld [vmem:[#allocation8 + $0x40] sm:$0xff]
          %v309 = vld [vmem:[#allocation8 + $0x48] sm:$0xff]
          %v310 = vld [vmem:[#allocation8 + $0x50] sm:$0xff]
          %v311 = vld [vmem:[#allocation8 + $0x58] sm:$0xff]
          %v312 = vld [vmem:[#allocation8 + $0x60] sm:$0xff]
          %v313 = vld [vmem:[#allocation8 + $0x68] sm:$0xff]
          %v314 = vld [vmem:[#allocation8 + $0x70] sm:$0xff]
          %v315 = vld [vmem:[#allocation8 + $0x78] sm:$0xff]
          %v316 = vld [vmem:[#allocation11] sm:$0xff]
          %v317 = vld [vmem:[#allocation11 + $0x8] sm:$0xff]
          %v318 = vld [vmem:[#allocation11 + $0x10] sm:$0xff]
          %v319 = vld [vmem:[#allocation11 + $0x18] sm:$0xff]
          %v320 = vld [vmem:[#allocation11 + $0x20] sm:$0xff]
          %v321 = vld [vmem:[#allocation11 + $0x28] sm:$0xff]
          %v322 = vld [vmem:[#allocation11 + $0x30] sm:$0xff]
          %v323 = vld [vmem:[#allocation11 + $0x38] sm:$0xff]
          %v324 = vld [vmem:[#allocation11 + $0x40] sm:$0xff]
          %v325 = vld [vmem:[#allocation11 + $0x48] sm:$0xff]
          %v326 = vld [vmem:[#allocation11 + $0x50] sm:$0xff]
          %v327 = vld [vmem:[#allocation11 + $0x58] sm:$0xff]
          %v328 = vld [vmem:[#allocation11 + $0x60] sm:$0xff]
          %v329 = vld [vmem:[#allocation11 + $0x68] sm:$0xff]
          %v330 = vld [vmem:[#allocation11 + $0x70] sm:$0xff]
          %v331 = vld [vmem:[#allocation11 + $0x78] sm:$0xff]
          %332 = vmatprep.subr.mxu0 0.0
          %333 = vmatpush1.msra.mxu0 %v315
          %334 = vmatprep.subr.mxu0 0.0
          %335 = vmatpush1.msra.mxu0 %v314
          %336 = vmatprep.subr.mxu0 0.0
          %337 = vmatpush1.msra.mxu0 %v313
          %338 = vmatprep.subr.mxu0 0.0
          %339 = vmatpush1.msra.mxu0 %v312
          %340 = vmatprep.subr.mxu0 0.0
          %341 = vmatpush1.msra.mxu0 %v311
          %342 = vmatprep.subr.mxu0 0.0
          %343 = vmatpush1.msra.mxu0 %v310
          %344 = vmatprep.subr.mxu0 0.0
          %345 = vmatpush1.msra.mxu0 %v309
          %346 = vmatprep.subr.mxu0 0.0
          %347 = vmatpush1.msra.mxu0 %v308
          %348 = vmatprep.subr.mxu0 0.0
          %349 = vmatpush1.msra.mxu0 %v307
          %350 = vmatprep.subr.mxu0 0.0
          %351 = vmatpush1.msra.mxu0 %v306
          %352 = vmatprep.subr.mxu0 0.0
          %353 = vmatpush1.msra.mxu0 %v305
          %354 = vmatprep.subr.mxu0 0.0
          %355 = vmatpush1.msra.mxu0 %v304
          %356 = vmatprep.subr.mxu0 0.0
          %357 = vmatpush1.msra.mxu0 %v303
          %358 = vmatprep.subr.mxu0 0.0
          %359 = vmatpush1.msra.mxu0 %v302
          %360 = vmatprep.subr.mxu0 0.0
          %361 = vmatpush1.msra.mxu0 %v301
          %362 = vmatprep.subr.mxu0 0.0
          %363 = vmatpush1.msra.mxu0 %v300
          %364 = vmatprep.subr.mxu0 0.0
          %365 = vmatpush2.msra.mxu0 0.0
          %366 = vmatprep.subr.mxu0 0.0
          %367 = vmatpush2.msra.mxu0 0.0
          %368 = vmatprep.subr.mxu0 0.0
          %369 = vmatpush2.msra.mxu0 0.0
          %370 = vmatprep.subr.mxu0 0.0
          %371 = vmatpush2.msra.mxu0 0.0
          %372 = vmatprep.subr.mxu0 0.0
          %373 = vmatpush2.msra.mxu0 0.0
          %374 = vmatprep.subr.mxu0 0.0
          %375 = vmatpush2.msra.mxu0 0.0
          %376 = vmatprep.subr.mxu0 0.0
          %377 = vmatpush2.msra.mxu0 0.0
          %378 = vmatprep.subr.mxu0 0.0
          %379 = vmatpush2.msra.mxu0 0.0
          %380 = vmatprep.subr.mxu0 0.0
          %381 = vmatpush2.msra.mxu0 0.0
          %382 = vmatprep.subr.mxu0 0.0
          %383 = vmatpush2.msra.mxu0 0.0
          %384 = vmatprep.subr.mxu0 0.0
          %385 = vmatpush2.msra.mxu0 0.0
          %386 = vmatprep.subr.mxu0 0.0
          %387 = vmatpush2.msra.mxu0 0.0
          %388 = vmatprep.subr.mxu0 0.0
          %389 = vmatpush2.msra.mxu0 0.0
          %390 = vmatprep.subr.mxu0 0.0
          %391 = vmatpush2.msra.mxu0 0.0
          %392 = vmatprep.subr.mxu0 0.0
          %393 = vmatpush2.msra.mxu0 0.0
          %394 = vmatprep.subr.mxu0 0.0
          %395 = vmatpush2.msra.mxu0 0.0
          %396 = vmatprep.mubr.f32.mxu0 0.0
          %397 = vmatmul.mubr.f32.gmra.mxu0 %v316
          %v398 = vpop.f32.mrf.mxu0
          %v399 = vadd.f32 0.0, %v398
          %v400 = vpop.f32.mrf.mxu0
          %401 = vmatprep.mubr.f32.mxu0 0.0
          %402 = vmatmul.mubr.f32.gmra.mxu0 %v317
          %v403 = vpop.f32.mrf.mxu0
          %v404 = vadd.f32 0.0, %v403
          %v405 = vpop.f32.mrf.mxu0
          %406 = vmatprep.mubr.f32.mxu0 0.0
          %407 = vmatmul.mubr.f32.gmra.mxu0 %v318
          %v408 = vpop.f32.mrf.mxu0
          %v409 = vadd.f32 0.0, %v408
          %v410 = vpop.f32.mrf.mxu0
          %411 = vmatprep.mubr.f32.mxu0 0.0
          %412 = vmatmul.mubr.f32.gmra.mxu0 %v319
          %v413 = vpop.f32.mrf.mxu0
          %v414 = vadd.f32 0.0, %v413
          %v415 = vpop.f32.mrf.mxu0
          %416 = vmatprep.mubr.f32.mxu0 0.0
          %417 = vmatmul.mubr.f32.gmra.mxu0 %v320
          %v418 = vpop.f32.mrf.mxu0
          %v419 = vadd.f32 0.0, %v418
          %v420 = vpop.f32.mrf.mxu0
          %421 = vmatprep.mubr.f32.mxu0 0.0
          %422 = vmatmul.mubr.f32.gmra.mxu0 %v321
          %v423 = vpop.f32.mrf.mxu0
          %v424 = vadd.f32 0.0, %v423
          %v425 = vpop.f32.mrf.mxu0
          %426 = vmatprep.mubr.f32.mxu0 0.0
          %427 = vmatmul.mubr.f32.gmra.mxu0 %v322
          %v428 = vpop.f32.mrf.mxu0
          %v429 = vadd.f32 0.0, %v428
          %v430 = vpop.f32.mrf.mxu0
          %431 = vmatprep.mubr.f32.mxu0 0.0
          %432 = vmatmul.mubr.f32.gmra.mxu0 %v323
          %v433 = vpop.f32.mrf.mxu0
          %v434 = vadd.f32 0.0, %v433
          %v435 = vpop.f32.mrf.mxu0
          %436 = vmatprep.mubr.f32.mxu0 0.0
          %437 = vmatmul.mubr.f32.gmra.mxu0 %v324
          %v438 = vpop.f32.mrf.mxu0
          %v439 = vadd.f32 0.0, %v438
          %v440 = vpop.f32.mrf.mxu0
          %441 = vmatprep.mubr.f32.mxu0 0.0
          %442 = vmatmul.mubr.f32.gmra.mxu0 %v325
          %v443 = vpop.f32.mrf.mxu0
          %v444 = vadd.f32 0.0, %v443
          %v445 = vpop.f32.mrf.mxu0
          %446 = vmatprep.mubr.f32.mxu0 0.0
          %447 = vmatmul.mubr.f32.gmra.mxu0 %v326
          %v448 = vpop.f32.mrf.mxu0
          %v449 = vadd.f32 0.0, %v448
          %v450 = vpop.f32.mrf.mxu0
          %451 = vmatprep.mubr.f32.mxu0 0.0
          %452 = vmatmul.mubr.f32.gmra.mxu0 %v327
          %v453 = vpop.f32.mrf.mxu0
          %v454 = vadd.f32 0.0, %v453
          %v455 = vpop.f32.mrf.mxu0
          %456 = vmatprep.mubr.f32.mxu0 0.0
          %457 = vmatmul.mubr.f32.gmra.mxu0 %v328
          %v458 = vpop.f32.mrf.mxu0
          %v459 = vadd.f32 0.0, %v458
          %v460 = vpop.f32.mrf.mxu0
          %461 = vmatprep.mubr.f32.mxu0 0.0
          %462 = vmatmul.mubr.f32.gmra.mxu0 %v329
          %v463 = vpop.f32.mrf.mxu0
          %v464 = vadd.f32 0.0, %v463
          %v465 = vpop.f32.mrf.mxu0
          %466 = vmatprep.mubr.f32.mxu0 0.0
          %467 = vmatmul.mubr.f32.gmra.mxu0 %v330
          %v468 = vpop.f32.mrf.mxu0
          %v469 = vadd.f32 0.0, %v468
          %v470 = vpop.f32.mrf.mxu0
          %471 = vmatprep.mubr.f32.mxu0 0.0
          %472 = vmatmul.mubr.f32.gmra.mxu0 %v331
          %v473 = vpop.f32.mrf.mxu0
          %v474 = vadd.f32 0.0, %v473
          %v475 = vpop.f32.mrf.mxu0
          %476 = vdwg.mxu0
          %477 = vxpose.xlu0.b32.start [1/16] %v399, 128
          %478 = vxpose.xlu0.b32.cont [2/16] %v404, 128
          %479 = vxpose.xlu0.b32.cont [3/16] %v409, 128
          %480 = vxpose.xlu0.b32.cont [4/16] %v414, 128
          %481 = vxpose.xlu0.b32.cont [5/16] %v419, 128
          %482 = vxpose.xlu0.b32.cont [6/16] %v424, 128
          %483 = vxpose.xlu0.b32.cont [7/16] %v429, 128
          %484 = vxpose.xlu0.b32.cont [8/16] %v434, 128
          %485 = vxpose.xlu0.b32.cont [9/16] %v439, 128
          %486 = vxpose.xlu0.b32.cont [10/16] %v444, 128
          %487 = vxpose.xlu0.b32.cont [11/16] %v449, 128
          %488 = vxpose.xlu0.b32.cont [12/16] %v454, 128
          %489 = vxpose.xlu0.b32.cont [13/16] %v459, 128
          %490 = vxpose.xlu0.b32.cont [14/16] %v464, 128
          %491 = vxpose.xlu0.b32.cont [15/16] %v469, 128
          %492 = vxpose.xlu0.b32.end [16/16] %v474, 128
          %v493 = vpop.trf.xlu0
          %v494 = vpop.trf.xlu0
          %v495 = vpop.trf.xlu0
          %v496 = vpop.trf.xlu0
          %v497 = vpop.trf.xlu0
          %v498 = vpop.trf.xlu0
          %v499 = vpop.trf.xlu0
          %v500 = vpop.trf.xlu0
          %v501 = vpop.trf.xlu0
          %v502 = vpop.trf.xlu0
          %v503 = vpop.trf.xlu0
          %v504 = vpop.trf.xlu0
          %v505 = vpop.trf.xlu0
          %v506 = vpop.trf.xlu0
          %v507 = vpop.trf.xlu0
          %v508 = vpop.trf.xlu0
          %509 = vst [vmem:[#allocation2] sm:$0xff] %v493
          %510 = vst [vmem:[#allocation2 + $0x8] sm:$0xff] %v494
          %511 = vst [vmem:[#allocation2 + $0x10] sm:$0xff] %v495
          %512 = vst [vmem:[#allocation2 + $0x18] sm:$0xff] %v496
          %513 = vst [vmem:[#allocation2 + $0x20] sm:$0xff] %v497
          %514 = vst [vmem:[#allocation2 + $0x28] sm:$0xff] %v498
          %515 = vst [vmem:[#allocation2 + $0x30] sm:$0xff] %v499
          %516 = vst [vmem:[#allocation2 + $0x38] sm:$0xff] %v500
          %517 = vst [vmem:[#allocation2 + $0x40] sm:$0xff] %v501
          %518 = vst [vmem:[#allocation2 + $0x48] sm:$0xff] %v502
          %519 = vst [vmem:[#allocation2 + $0x50] sm:$0xff] %v503
          %520 = vst [vmem:[#allocation2 + $0x58] sm:$0xff] %v504
          %521 = vst [vmem:[#allocation2 + $0x60] sm:$0xff] %v505
          %522 = vst [vmem:[#allocation2 + $0x68] sm:$0xff] %v506
          %523 = vst [vmem:[#allocation2 + $0x70] sm:$0xff] %v507
          %524 = vst [vmem:[#allocation2 + $0x78] sm:$0xff] %v508
          %v525 = vmul.f32 %v399, %v399
          %v526 = vmul.f32 %v404, %v404
          %v527 = vmul.f32 %v409, %v409
          %v528 = vmul.f32 %v414, %v414
          %v529 = vmul.f32 %v419, %v419
          %v530 = vmul.f32 %v424, %v424
          %v531 = vmul.f32 %v429, %v429
          %v532 = vmul.f32 %v434, %v434
          %v533 = vmul.f32 %v439, %v439
          %v534 = vmul.f32 %v444, %v444
          %v535 = vmul.f32 %v449, %v449
          %v536 = vmul.f32 %v454, %v454
          %v537 = vmul.f32 %v459, %v459
          %v538 = vmul.f32 %v464, %v464
          %v539 = vmul.f32 %v469, %v469
          %v540 = vmul.f32 %v474, %v474
          %541 = vadd.xlane.f32.xlu0 %v525
          %v542 = vpop.xlane.xlu0 %541
          %543 = vadd.xlane.f32.xlu0 %v526
          %v544 = vpop.xlane.xlu0 %543
          %545 = vadd.xlane.f32.xlu0 %v527
          %v546 = vpop.xlane.xlu0 %545
          %547 = vadd.xlane.f32.xlu0 %v528
          %v548 = vpop.xlane.xlu0 %547
          %549 = vadd.xlane.f32.xlu0 %v529
          %v550 = vpop.xlane.xlu0 %549
          %551 = vadd.xlane.f32.xlu0 %v530
          %v552 = vpop.xlane.xlu0 %551
          %553 = vadd.xlane.f32.xlu0 %v531
          %v554 = vpop.xlane.xlu0 %553
          %555 = vadd.xlane.f32.xlu0 %v532
          %v556 = vpop.xlane.xlu0 %555
          %557 = vadd.xlane.f32.xlu0 %v533
          %v558 = vpop.xlane.xlu0 %557
          %559 = vadd.xlane.f32.xlu0 %v534
          %v560 = vpop.xlane.xlu0 %559
          %561 = vadd.xlane.f32.xlu0 %v535
          %v562 = vpop.xlane.xlu0 %561
          %563 = vadd.xlane.f32.xlu0 %v536
          %v564 = vpop.xlane.xlu0 %563
          %565 = vadd.xlane.f32.xlu0 %v537
          %v566 = vpop.xlane.xlu0 %565
          %567 = vadd.xlane.f32.xlu0 %v538
          %v568 = vpop.xlane.xlu0 %567
          %569 = vadd.xlane.f32.xlu0 %v539
          %v570 = vpop.xlane.xlu0 %569
          %571 = vadd.xlane.f32.xlu0 %v540
          %v572 = vpop.xlane.xlu0 %571
          %v573 = vlaneseq
          %v574 = vand.u32 %v573, 127
          %vm575 = vcmp.lt.s32.totalorder %v574, 8
          %v592 = vlaneseq
          %v593 = vshrl.u32 %v592, 7
          %v594 = vsub.s32 %v574, %v593
          %v595 = vrot.slane %v542, %v594
          %v596 = vadd.s32 %v574, 4294967288
          %v597 = vlaneseq
          %v598 = vshrl.u32 %v597, 7
          %v599 = vsub.s32 %v596, %v598
          %v600 = vrot.slane %v544, %v599
          %vm601 = vcmask 130112
          %v602 = vsel %vm601, %v600, %v595
          %v603 = vadd.s32 %v574, 4294967280
          %v604 = vlaneseq
          %v605 = vshrl.u32 %v604, 7
          %v606 = vsub.s32 %v603, %v605
          %v607 = vrot.slane %v546, %v606
          %vm608 = vcmask 195712
          %v609 = vsel %vm608, %v607, %v602
          %v610 = vadd.s32 %v574, 4294967272
          %v611 = vlaneseq
          %v612 = vshrl.u32 %v611, 7
          %v613 = vsub.s32 %v610, %v612
          %v614 = vrot.slane %v548, %v613
          %vm615 = vcmask 261312
          %v616 = vsel %vm615, %v614, %v609
          %v617 = vadd.s32 %v574, 4294967264
          %v618 = vlaneseq
          %v619 = vshrl.u32 %v618, 7
          %v620 = vsub.s32 %v617, %v619
          %v621 = vrot.slane %v550, %v620
          %vm622 = vcmask 326912
          %v623 = vsel %vm622, %v621, %v616
          %v624 = vadd.s32 %v574, 4294967256
          %v625 = vlaneseq
          %v626 = vshrl.u32 %v625, 7
          %v627 = vsub.s32 %v624, %v626
          %v628 = vrot.slane %v552, %v627
          %vm629 = vcmask 392512
          %v630 = vsel %vm629, %v628, %v623
          %v631 = vadd.s32 %v574, 4294967248
          %v632 = vlaneseq
          %v633 = vshrl.u32 %v632, 7
          %v634 = vsub.s32 %v631, %v633
          %v635 = vrot.slane %v554, %v634
          %vm636 = vcmask 458112
          %v637 = vsel %vm636, %v635, %v630
          %v638 = vadd.s32 %v574, 4294967240
          %v639 = vlaneseq
          %v640 = vshrl.u32 %v639, 7
          %v641 = vsub.s32 %v638, %v640
          %v642 = vrot.slane %v556, %v641
          %vm643 = vcmask 523712
          %v644 = vsel %vm643, %v642, %v637
          %v645 = vadd.s32 %v574, 4294967232
          %v646 = vlaneseq
          %v647 = vshrl.u32 %v646, 7
          %v648 = vsub.s32 %v645, %v647
          %v649 = vrot.slane %v558, %v648
          %vm650 = vcmask 589312
          %v651 = vsel %vm650, %v649, %v644
          %v652 = vadd.s32 %v574, 4294967224
          %v653 = vlaneseq
          %v654 = vshrl.u32 %v653, 7
          %v655 = vsub.s32 %v652, %v654
          %v656 = vrot.slane %v560, %v655
          %vm657 = vcmask 654912
          %v658 = vsel %vm657, %v656, %v651
          %v659 = vadd.s32 %v574, 4294967216
          %v660 = vlaneseq
          %v661 = vshrl.u32 %v660, 7
          %v662 = vsub.s32 %v659, %v661
          %v663 = vrot.slane %v562, %v662
          %vm664 = vcmask 720512
          %v665 = vsel %vm664, %v663, %v658
          %v666 = vadd.s32 %v574, 4294967208
          %v667 = vlaneseq
          %v668 = vshrl.u32 %v667, 7
          %v669 = vsub.s32 %v666, %v668
          %v670 = vrot.slane %v564, %v669
          %vm671 = vcmask 786112
          %v672 = vsel %vm671, %v670, %v665
          %v673 = vadd.s32 %v574, 4294967200
          %v674 = vlaneseq
          %v675 = vshrl.u32 %v674, 7
          %v676 = vsub.s32 %v673, %v675
          %v677 = vrot.slane %v566, %v676
          %vm678 = vcmask 851712
          %v679 = vsel %vm678, %v677, %v672
          %v680 = vadd.s32 %v574, 4294967192
          %v681 = vlaneseq
          %v682 = vshrl.u32 %v681, 7
          %v683 = vsub.s32 %v680, %v682
          %v684 = vrot.slane %v568, %v683
          %vm685 = vcmask 917312
          %v686 = vsel %vm685, %v684, %v679
          %v687 = vadd.s32 %v574, 4294967184
          %v688 = vlaneseq
          %v689 = vshrl.u32 %v688, 7
          %v690 = vsub.s32 %v687, %v689
          %v691 = vrot.slane %v570, %v690
          %vm692 = vcmask 982912
          %v693 = vsel %vm692, %v691, %v686
          %v694 = vadd.s32 %v574, 4294967176
          %v695 = vlaneseq
          %v696 = vshrl.u32 %v695, 7
          %v697 = vsub.s32 %v694, %v696
          %v698 = vrot.slane %v572, %v697
          %vm699 = vcmask 1048512
          %v700 = vsel %vm699, %v698, %v693
          %v702 = vsel %vm575, %v700, 1e+30
          %703 = vst [vmem:[#allocation3] sm:$0x1] %v702
          %vm704 = vcmask 7168
          %705 = vst.msk [vmem:[#allocation4] sm:$0xff] %vm704, 0.0
        $region56: #{tpu_custom_call.1} parent=35 // pred_fallthru
          _
        %v706 = vld [vmem:[%s247] sm:$0xff]
        %v707 = vld [vmem:[%s260] sm:$0xff]
        %v708 = vmul.f32 %v706, %v706
        %709 = vadd.xlane.f32.xlu0 %v708
        %v710 = vpop.xlane.xlu0 %709
        %v711 = vmax.f32 %v710, 1e-24
        %v712 = vrsqrt.pop %v711
        %v713 = vmul.f32 %v706, %v712
        %v714 = vmul.f32 %v710, %v712
        %v715 = vmul.f32 %v714, %v712
        %v716 = vld [vmem:[#allocation8] sm:$0xff]
        %v717 = vld [vmem:[#allocation8 + $0x8] sm:$0xff]
        %v718 = vld [vmem:[#allocation8 + $0x10] sm:$0xff]
        %v719 = vld [vmem:[#allocation8 + $0x18] sm:$0xff]
        %v720 = vld [vmem:[#allocation8 + $0x20] sm:$0xff]
        %v721 = vld [vmem:[#allocation8 + $0x28] sm:$0xff]
        %v722 = vld [vmem:[#allocation8 + $0x30] sm:$0xff]
        %v723 = vld [vmem:[#allocation8 + $0x38] sm:$0xff]
        %v724 = vld [vmem:[#allocation8 + $0x40] sm:$0xff]
        %v725 = vld [vmem:[#allocation8 + $0x48] sm:$0xff]
        %v726 = vld [vmem:[#allocation8 + $0x50] sm:$0xff]
        %v727 = vld [vmem:[#allocation8 + $0x58] sm:$0xff]
        %v728 = vld [vmem:[#allocation8 + $0x60] sm:$0xff]
        %v729 = vld [vmem:[#allocation8 + $0x68] sm:$0xff]
        %v730 = vld [vmem:[#allocation8 + $0x70] sm:$0xff]
        %v731 = vld [vmem:[#allocation8 + $0x78] sm:$0xff]
        %732 = vmatprep.subr.mxu0 0.0
        %733 = vmatpush1.msra.mxu0 %v731
        %734 = vmatprep.subr.mxu0 0.0
        %735 = vmatpush1.msra.mxu0 %v730
        %736 = vmatprep.subr.mxu0 0.0
        %737 = vmatpush1.msra.mxu0 %v729
        %738 = vmatprep.subr.mxu0 0.0
        %739 = vmatpush1.msra.mxu0 %v728
        %740 = vmatprep.subr.mxu0 0.0
        %741 = vmatpush1.msra.mxu0 %v727
        %742 = vmatprep.subr.mxu0 0.0
        %743 = vmatpush1.msra.mxu0 %v726
        %744 = vmatprep.subr.mxu0 0.0
        %745 = vmatpush1.msra.mxu0 %v725
        %746 = vmatprep.subr.mxu0 0.0
        %747 = vmatpush1.msra.mxu0 %v724
        %748 = vmatprep.subr.mxu0 0.0
        %749 = vmatpush1.msra.mxu0 %v723
        %750 = vmatprep.subr.mxu0 0.0
        %751 = vmatpush1.msra.mxu0 %v722
        %752 = vmatprep.subr.mxu0 0.0
        %753 = vmatpush1.msra.mxu0 %v721
        %754 = vmatprep.subr.mxu0 0.0
        %755 = vmatpush1.msra.mxu0 %v720
        %756 = vmatprep.subr.mxu0 0.0
        %757 = vmatpush1.msra.mxu0 %v719
        %758 = vmatprep.subr.mxu0 0.0
        %759 = vmatpush1.msra.mxu0 %v718
        %760 = vmatprep.subr.mxu0 0.0
        %761 = vmatpush1.msra.mxu0 %v717
        %762 = vmatprep.subr.mxu0 0.0
        %763 = vmatpush1.msra.mxu0 %v716
        %764 = vmatprep.subr.mxu0 0.0
        %765 = vmatpush2.msra.mxu0 0.0
        %766 = vmatprep.subr.mxu0 0.0
        %767 = vmatpush2.msra.mxu0 0.0
        %768 = vmatprep.subr.mxu0 0.0
        %769 = vmatpush2.msra.mxu0 0.0
        %770 = vmatprep.subr.mxu0 0.0
        %771 = vmatpush2.msra.mxu0 0.0
        %772 = vmatprep.subr.mxu0 0.0
        %773 = vmatpush2.msra.mxu0 0.0
        %774 = vmatprep.subr.mxu0 0.0
        %775 = vmatpush2.msra.mxu0 0.0
        %776 = vmatprep.subr.mxu0 0.0
        %777 = vmatpush2.msra.mxu0 0.0
        %778 = vmatprep.subr.mxu0 0.0
        %779 = vmatpush2.msra.mxu0 0.0
        %780 = vmatprep.subr.mxu0 0.0
        %781 = vmatpush2.msra.mxu0 0.0
        %782 = vmatprep.subr.mxu0 0.0
        %783 = vmatpush2.msra.mxu0 0.0
        %784 = vmatprep.subr.mxu0 0.0
        %785 = vmatpush2.msra.mxu0 0.0
        %786 = vmatprep.subr.mxu0 0.0
        %787 = vmatpush2.msra.mxu0 0.0
        %788 = vmatprep.subr.mxu0 0.0
        %789 = vmatpush2.msra.mxu0 0.0
        %790 = vmatprep.subr.mxu0 0.0
        %791 = vmatpush2.msra.mxu0 0.0
        %792 = vmatprep.subr.mxu0 0.0
        %793 = vmatpush2.msra.mxu0 0.0
        %794 = vmatprep.subr.mxu0 0.0
        %795 = vmatpush2.msra.mxu0 0.0
        %796 = vmatprep.mubr.f32.mxu0 0.0
        %797 = vmatmul.mubr.f32.gmra.mxu0 %v707
        %v798 = vpop.f32.mrf.mxu0
        %v799 = vadd.f32 0.0, %v798
        %v800 = vpop.f32.mrf.mxu0
        %801 = vdwg.mxu0
        %v802 = vsub.f32 %v713, %v799
        %v803 = vmul.f32 %v802, %v802
        %804 = vadd.xlane.f32.xlu0 %v803
        %v805 = vpop.xlane.xlu0 %804
        %v806 = vrsqrt.pop %v805
        %v807 = vmul.f32 %v805, %v806
        %vm808 = vcmp.eq.f32.partialorder %v805, inf
        %v809 = vsel %vm808, %v805, %v807
        %vm810 = vcmp.eq.f32.partialorder %v805, 0.0
        %v811 = vand.u32 %v805, 2147483648
        %v812 = vsel %vm810, %v811, %v809
        %v813 = vld [vmem:[#allocation2] sm:$0xff]
        %v814 = vld [vmem:[#allocation2 + $0x8] sm:$0xff]
        %v815 = vld [vmem:[#allocation2 + $0x10] sm:$0xff]
        %v816 = vld [vmem:[#allocation2 + $0x18] sm:$0xff]
        %v817 = vld [vmem:[#allocation2 + $0x20] sm:$0xff]
        %v818 = vld [vmem:[#allocation2 + $0x28] sm:$0xff]
        %v819 = vld [vmem:[#allocation2 + $0x30] sm:$0xff]
        %v820 = vld [vmem:[#allocation2 + $0x38] sm:$0xff]
        %v821 = vld [vmem:[#allocation2 + $0x40] sm:$0xff]
        %v822 = vld [vmem:[#allocation2 + $0x48] sm:$0xff]
        %v823 = vld [vmem:[#allocation2 + $0x50] sm:$0xff]
        %v824 = vld [vmem:[#allocation2 + $0x58] sm:$0xff]
        %v825 = vld [vmem:[#allocation2 + $0x60] sm:$0xff]
        %v826 = vld [vmem:[#allocation2 + $0x68] sm:$0xff]
        %v827 = vld [vmem:[#allocation2 + $0x70] sm:$0xff]
        %v828 = vld [vmem:[#allocation2 + $0x78] sm:$0xff]
        %829 = vmatprep.subr.mxu0 0.0
        %830 = vmatpush1.msra.mxu0 %v828
        %831 = vmatprep.subr.mxu0 0.0
        %832 = vmatpush1.msra.mxu0 %v827
        %833 = vmatprep.subr.mxu0 0.0
        %834 = vmatpush1.msra.mxu0 %v826
        %835 = vmatprep.subr.mxu0 0.0
        %836 = vmatpush1.msra.mxu0 %v825
        %837 = vmatprep.subr.mxu0 0.0
        %838 = vmatpush1.msra.mxu0 %v824
        %839 = vmatprep.subr.mxu0 0.0
        %840 = vmatpush1.msra.mxu0 %v823
        %841 = vmatprep.subr.mxu0 0.0
        %842 = vmatpush1.msra.mxu0 %v822
        %843 = vmatprep.subr.mxu0 0.0
        %844 = vmatpush1.msra.mxu0 %v821
        %845 = vmatprep.subr.mxu0 0.0
        %846 = vmatpush1.msra.mxu0 %v820
        %847 = vmatprep.subr.mxu0 0.0
        %848 = vmatpush1.msra.mxu0 %v819
        %849 = vmatprep.subr.mxu0 0.0
        %850 = vmatpush1.msra.mxu0 %v818
        %851 = vmatprep.subr.mxu0 0.0
        %852 = vmatpush1.msra.mxu0 %v817
        %853 = vmatprep.subr.mxu0 0.0
        %854 = vmatpush1.msra.mxu0 %v816
        %855 = vmatprep.subr.mxu0 0.0
        %856 = vmatpush1.msra.mxu0 %v815
        %857 = vmatprep.subr.mxu0 0.0
        %858 = vmatpush1.msra.mxu0 %v814
        %859 = vmatprep.subr.mxu0 0.0
        %860 = vmatpush1.msra.mxu0 %v813
        %861 = vmatprep.subr.mxu0 0.0
        %862 = vmatpush2.msra.mxu0 0.0
        %863 = vmatprep.subr.mxu0 0.0
        %864 = vmatpush2.msra.mxu0 0.0
        %865 = vmatprep.subr.mxu0 0.0
        %866 = vmatpush2.msra.mxu0 0.0
        %867 = vmatprep.subr.mxu0 0.0
        %868 = vmatpush2.msra.mxu0 0.0
        %869 = vmatprep.subr.mxu0 0.0
        %870 = vmatpush2.msra.mxu0 0.0
        %871 = vmatprep.subr.mxu0 0.0
        %872 = vmatpush2.msra.mxu0 0.0
        %873 = vmatprep.subr.mxu0 0.0
        %874 = vmatpush2.msra.mxu0 0.0
        %875 = vmatprep.subr.mxu0 0.0
        %876 = vmatpush2.msra.mxu0 0.0
        %877 = vmatprep.subr.mxu0 0.0
        %878 = vmatpush2.msra.mxu0 0.0
        %879 = vmatprep.subr.mxu0 0.0
        %880 = vmatpush2.msra.mxu0 0.0
        %881 = vmatprep.subr.mxu0 0.0
        %882 = vmatpush2.msra.mxu0 0.0
        %883 = vmatprep.subr.mxu0 0.0
        %884 = vmatpush2.msra.mxu0 0.0
        %885 = vmatprep.subr.mxu0 0.0
        %886 = vmatpush2.msra.mxu0 0.0
        %887 = vmatprep.subr.mxu0 0.0
        %888 = vmatpush2.msra.mxu0 0.0
        %889 = vmatprep.subr.mxu0 0.0
        %890 = vmatpush2.msra.mxu0 0.0
        %891 = vmatprep.subr.mxu0 0.0
        %892 = vmatpush2.msra.mxu0 0.0
        %893 = vmatprep.mubr.f32.mxu0 0.0
        %894 = vmatmul.mubr.f32.gmra.mxu0 %v713
        %v895 = vpop.f32.mrf.mxu0
        %v896 = vadd.f32 0.0, %v895
        %v897 = vpop.f32.mrf.mxu0
        %898 = vdwg.mxu0
        %v899 = vld [vmem:[#allocation3] sm:$0x1]
        %v901 = vlaneseq
        %v902 = vshrl.u32 %v901, 7
        %v903 = vsub.s32 0, %v902
        %v904 = vrot.slane %v899, %v903
        %v906 = vadd.f32 %v715, %v904
        %v907 = vmul.f32 %v896, 2.0
        %v908 = vsub.f32 %v906, %v907
        %v909 = vmax.f32 %v908, 0.0
        %v910 = vrsqrt.pop %v909
        %v911 = vmul.f32 %v909, %v910
        %vm912 = vcmp.eq.f32.partialorder %v909, inf
        %v913 = vsel %vm912, %v909, %v911
        %vm914 = vcmp.eq.f32.partialorder %v909, 0.0
        %v915 = vand.u32 %v909, 2147483648
        %v916 = vsel %vm914, %v915, %v913
        %v917 = vmul.f32 %v707, 10000.0
        %v918 = vadd.f32 %v916, %v917
        %919 = vmin.xlane.f32.xlu0 %v918
        %v920 = vpop.xlane.xlu0 %919
        %v921 = vadd.f32 %v812, 1.0
        %v922 = vsub.f32 %v921, %v920
        %s923 = sadd.s32 %s26, %s27
        %s924 = smul.u32 %s923, 8
        %s925 = sadd.s32 %s924, 8
        %p926 = scmp.gt.s32.totalorder %s925, 8
        // Predicated region
        $region57: #{tpu_custom_call.1} parent=35 // pred_check
          %p927 = pneg %p926
        $region58: #{tpu_custom_call.1} parent=35 // pred_check_branch
          %929 = sbr.rel (%p927) target = $region60
        $region59: #{tpu_custom_call.1} parent=35 // pred_region
          %v930 = vlaneseq
          %v931 = vshrl.u32 %v930, 7
          %v932 = vstv %s924
          %v933 = vadd.s32 %v932, %v931
          %v934 = vld [vmem:[#allocation4] sm:$0xff]
          %vm935 = vcmp.lt.s32.totalorder %v933, 8
          %v936 = vsel %vm935, %v922, 0.0
          %v937 = vadd.f32 %v934, %v936
          %vm938 = vcmask 7168
          %939 = vst.msk [vmem:[#allocation4] sm:$0xff] %vm938, %v937
        $region60: #{tpu_custom_call.1} parent=35 // pred_fallthru
          _
        %p940 = scmp.le.s32.totalorder %s925, 8
        // Predicated region
        $region61: #{tpu_custom_call.1} parent=35 // pred_check
          %p941 = pneg %p940
        $region62: #{tpu_custom_call.1} parent=35 // pred_check_branch
          %943 = sbr.rel (%p941) target = $region64
        $region63: #{tpu_custom_call.1} parent=35 // pred_region
          %v944 = vld [vmem:[#allocation4] sm:$0xff]
          %v945 = vadd.f32 %v944, %v922
          %vm946 = vcmask 7168
          %947 = vst.msk [vmem:[#allocation4] sm:$0xff] %vm946, %v945
        $region64: #{tpu_custom_call.1} parent=35 // pred_fallthru
          _
        // Predicated region
        $region65: #{tpu_custom_call.1} parent=35 // pred_check
          %p948 = pneg %p296
        $region66: #{tpu_custom_call.1} parent=35 // pred_check_branch
          %950 = sbr.rel (%p948) target = $region68
        $region67: #{tpu_custom_call.1} parent=35 // pred_region
          %v951 = vld [vmem:[#allocation4] sm:$0xff]
          %vm952 = vcmask 7168
          %v953 = vsel %vm952, %v951, 0.0
          %954 = vadd.xlane.f32.xlu0 %v953
          %v955 = vpop.xlane.xlu0 %954
          %v956 = vrot.slane %v955, 4
          %v957 = vadd.f32 %v955, %v956
          %v958 = vrot.slane %v957, 2
          %v959 = vadd.f32 %v957, %v958
          %v960 = vrot.slane %v959, 1
          %v961 = vadd.f32 %v959, %v960
          %s962 = vtos %v961
          %s963 = smul.f32 %s962, 0.125
          %v964 = vstv %s963
          %965 = vst [vmem:[%s293] sm:$0xff] %v964
        $region68: #{tpu_custom_call.1} parent=35 // pred_fallthru
          _
        %s966 = sand.u32 %s140, 1
        %s967 = scalar_lea.sflag [#allocation7], %s966
        %s968 = sand.u32 %s140, 1
        %s969 = smul.addr %s968, 8
        %s970 = scalar_lea.vmem [#allocation12], %s969
        // Predicated region
        $region69: #{tpu_custom_call.1} parent=35 // pred_check
          %p971 = pneg %p150
        $region70: #{tpu_custom_call.1} parent=35 // pred_check_branch
          %973 = sbr.rel (%p971) target = $region72
        $region71: #{tpu_custom_call.1} parent=35 // pred_region
          %s975 = ssub.s32 128, 128
          %976 = vsyncadd %s967, %s975
          %s977 = smul.addr %s26, 128
          %s978 = scalar_lea.hbm %s4, %s977
          %s980 = sshll.u32 %s970, 4
          %s981 = int_to_ptr.vmem [resolvable:$true] %s980
          %983 = dma.vmem_to_hbm [thread:$0]  %s981, 128, %s978, %s967
        $region72: #{tpu_custom_call.1} parent=35 // pred_fallthru
          _
      $region36: #{tpu_custom_call.1} parent=5 // pred_fallthru
        _
      %p984 = scmp.le.s32.totalorder 2, %s17
      // Predicated region
      $region73: #{tpu_custom_call.1} parent=5 // pred_check
        %p985 = pneg %p984
      $region74: #{tpu_custom_call.1} parent=5 // pred_check_branch
        %987 = sbr.rel (%p985) target = $region76
      $region75: #{tpu_custom_call.1} parent=5 // pred_region
        %s988 = ssub.s32 %s17, 2
        // Predicated region
        $region77: #{tpu_custom_call.1} parent=75 // pred_check
          %p989 = pneg %p156
        $region78: #{tpu_custom_call.1} parent=75 // pred_check_branch
          %991 = sbr.rel (%p989) target = $region80
        $region79: #{tpu_custom_call.1} parent=75 // pred_region
          %s992 = sand.u32 %s141, 1
          %s993 = scalar_lea.sflag [#allocation7], %s992
          %s994 = sand.u32 %s141, 1
          %s995 = smul.addr %s994, 8
          %s996 = scalar_lea.vmem [#allocation12], %s995
          %997 = dma.done %s993, 128
        $region80: #{tpu_custom_call.1} parent=75 // pred_fallthru
          _
      $region76: #{tpu_custom_call.1} parent=5 // pred_fallthru
        _
    $region6: #{tpu_custom_call.1} parent=1 // loop_footer
      %s21 = sadd.s32 1, %s17
    $region7: #{tpu_custom_call.1} parent=1 // loop_footer_branch
      %16 = sbr.rel target = $region3
    $region8: #{tpu_custom_call.1} parent=1 // loop_exit
      _
    %998 = vsyncpa [#allocation6], 1
    %s999 = scalar_lea.sflag [#allocation6], 1
    %1000 = vsyncpa %s999, 1
    %1001 = vsyncpa [#allocation9], 1
    %1002 = vsyncpa [#allocation7], 1
    %s1003 = scalar_lea.sflag [#allocation7], 1
    %1004 = vsyncpa %s1003, 1

</llo_original>
